<compile_context>
chip_gen: v7x
topology: tpu7x:2x2x1
jax: 0.10.0
libtpu: 0.0.40
codegen_flags: <defaults>
</compile_context>

<pallas_src>
import math

import jax
import jax.numpy as jnp
from jax import lax
from jax.experimental import pallas as pl
from jax.experimental.pallas import tpu as pltpu


def _softplus(x):
    # Overflow-free softplus, matches F.softplus(x) = log(1 + exp(x)).
    return jnp.maximum(x, 0.0) + jnp.log1p(jnp.exp(-jnp.abs(x)))


def _round_up(x, m):
    return ((x + m - 1) // m) * m


def _tile_and_pad(dim, pref, align):
    """Return (tile, padded_dim) with tile % align == 0 and padded % tile == 0."""
    d = _round_up(dim, align)
    if d <= pref:
        return d, d
    return pref, _round_up(d, pref)


# Contract the last (K) dim of both operands -> MXU-friendly, no transpose.
_CONTRACT_LAST = (((1,), (1,)), ((), ()))


def _bnn_sample_kernel(x_ref, wmu_ref, wsig_ref, nw_ref,
                       bmu_ref, bsig_ref, nb_ref, o_ref, acc_ref):
    k = pl.program_id(2)

    @pl.when(k == 0)
    def _():
        acc_ref[...] = jnp.zeros_like(acc_ref)

    # Reparameterized weight sample for this (tn, tk) tile, in f32.
    w = wmu_ref[...] + _softplus(wsig_ref[...]) * nw_ref[...]

    # bf16 operands, f32 accumulation; K-vs-K contraction (no w.T).
    acc_ref[...] += lax.dot_general(
        x_ref[...].astype(jnp.bfloat16), w.astype(jnp.bfloat16),
        dimension_numbers=_CONTRACT_LAST,
        preferred_element_type=jnp.float32)

    @pl.when(k == pl.num_programs(2) - 1)
    def _():
        b = bmu_ref[...] + _softplus(bsig_ref[...]) * nb_ref[...]   # (1, tn)
        o_ref[...] = (acc_ref[...] + b).astype(o_ref.dtype)


def _bnn_mean_kernel(x_ref, wmu_ref, bmu_ref, o_ref, acc_ref):
    k = pl.program_id(2)

    @pl.when(k == 0)
    def _():
        acc_ref[...] = jnp.zeros_like(acc_ref)

    acc_ref[...] += lax.dot_general(
        x_ref[...].astype(jnp.bfloat16), wmu_ref[...].astype(jnp.bfloat16),
        dimension_numbers=_CONTRACT_LAST,
        preferred_element_type=jnp.float32)

    @pl.when(k == pl.num_programs(2) - 1)
    def _():
        o_ref[...] = (acc_ref[...] + bmu_ref[...]).astype(o_ref.dtype)


def bnn_linear_forward(x, q_weight_mu, q_weight_sig, q_bias_mu, q_bias_sig,
                       sample_W, key=None, noise_w=None, noise_b=None,
                       tm=256, tn=256, tk=512):
    """BNNLinear.forward.

    x:            (B, in_features)
    q_weight_mu:  (out_features, in_features)
    q_weight_sig: (out_features, in_features)   (pre-softplus)
    q_bias_mu:    (out_features,)
    q_bias_sig:   (out_features,)               (pre-softplus)
    sample_W:     if True, use reparameterized sample; else posterior mean.
    """
    B, K = x.shape
    N, K2 = q_weight_mu.shape
    assert K == K2, "shape mismatch between x and q_weight_mu"

    f32 = jnp.float32
    tm, Bp = _tile_and_pad(B, tm, 8)      # sublane axis
    tn, Np = _tile_and_pad(N, tn, 128)    # lane axis of output / weights
    tk, Kp = _tile_and_pad(K, tk, 128)    # contraction axis
    grid = (Bp // tm, Np // tn, Kp // tk)

    x_p = jnp.pad(x.astype(f32), ((0, Bp - B), (0, Kp - K)))
    wmu_p = jnp.pad(q_weight_mu.astype(f32), ((0, Np - N), (0, Kp - K)))
    bmu_p = jnp.pad(q_bias_mu.astype(f32), (0, Np - N)).reshape(1, Np)

    x_spec = pl.BlockSpec((tm, tk), lambda i, j, k: (i, k))
    w_spec = pl.BlockSpec((tn, tk), lambda i, j, k: (j, k))
    b_spec = pl.BlockSpec((1, tn), lambda i, j, k: (0, j))
    o_spec = pl.BlockSpec((tm, tn), lambda i, j, k: (i, j))

    def _params_and_cost(n_wstreams, transcendentals):
        # x tile + weight-stream tiles + bias tiles + out tile, double-buffered,
        # plus the f32 accumulator.
        tile_bytes = 4 * (tm * tk + n_wstreams * tn * tk + n_wstreams * tn
                          + tm * tn)
        vmem_bytes = 2 * tile_bytes + 4 * tm * tn
        vmem_limit = int(min(max(2 * vmem_bytes, 16 * 1024 * 1024),
                             48 * 1024 * 1024))
        params = pltpu.CompilerParams(
            dimension_semantics=("parallel", "parallel", "arbitrary"),
            vmem_limit_bytes=vmem_limit)
        cost = pl.CostEstimate(
            flops=2 * Bp * Np * Kp,
            transcendentals=int(transcendentals),
            bytes_accessed=4 * (Bp * Kp + n_wstreams * Np * Kp + Np + Bp * Np))
        return params, cost

    if sample_W:
        if noise_w is None or noise_b is None:
            assert key is not None, "sample_W=True needs `key` or explicit noise"
            kw, kb = jax.random.split(key)
            if noise_w is None:
                noise_w = jax.random.normal(kw, (N, K), dtype=f32)
            if noise_b is None:
                noise_b = jax.random.normal(kb, (N,), dtype=f32)

        wsig_p = jnp.pad(q_weight_sig.astype(f32), ((0, Np - N), (0, Kp - K)))
        bsig_p = jnp.pad(q_bias_sig.astype(f32), (0, Np - N)).reshape(1, Np)
        nw_p = jnp.pad(noise_w.astype(f32), ((0, Np - N), (0, Kp - K)))
        nb_p = jnp.pad(noise_b.astype(f32), (0, Np - N)).reshape(1, Np)

        params, cost = _params_and_cost(
            n_wstreams=3, transcendentals=2 * grid[0] * Np * Kp)
        out_p = pl.pallas_call(
            _bnn_sample_kernel,
            out_shape=jax.ShapeDtypeStruct((Bp, Np), f32),
            grid_spec=pltpu.PrefetchScalarGridSpec(
                num_scalar_prefetch=0,
                grid=grid,
                in_specs=[x_spec, w_spec, w_spec, w_spec,
                          b_spec, b_spec, b_spec],
                out_specs=o_spec,
                scratch_shapes=[pltpu.VMEM((tm, tn), f32)]),
            compiler_params=params,
            cost_estimate=cost,
        )(x_p, wmu_p, wsig_p, nw_p, bmu_p, bsig_p, nb_p)
    else:
        params, cost = _params_and_cost(n_wstreams=1, transcendentals=0)
        out_p = pl.pallas_call(
            _bnn_mean_kernel,
            out_shape=jax.ShapeDtypeStruct((Bp, Np), f32),
            grid_spec=pltpu.PrefetchScalarGridSpec(
                num_scalar_prefetch=0,
                grid=grid,
                in_specs=[x_spec, w_spec, b_spec],
                out_specs=o_spec,
                scratch_shapes=[pltpu.VMEM((tm, tn), f32)]),
            compiler_params=params,
            cost_estimate=cost,
        )(x_p, wmu_p, bmu_p)

    return out_p[:B, :N]


def init_bnn_linear_params(in_features, out_features, key, init_type="uniform"):
    """Parameter init mirroring BNNLinear.initialize_params."""
    if init_type == "uniform":
        bound = 1.0 / math.sqrt(in_features)
        q_weight_mu = jax.random.uniform(
            key, (out_features, in_features), minval=-bound, maxval=bound,
            dtype=jnp.float32)
        q_bias_mu = jnp.zeros((out_features,), dtype=jnp.float32)
    else:  # 'normal'
        kw, kb = jax.random.split(key)
        q_weight_mu = jax.random.normal(kw, (out_features, in_features),
                                        dtype=jnp.float32)
        q_bias_mu = jax.random.normal(kb, (out_features,), dtype=jnp.float32)
    q_weight_sig = jnp.full((out_features, in_features), -4.0, dtype=jnp.float32)
    q_bias_sig = jnp.full((out_features,), -4.0, dtype=jnp.float32)
    return q_weight_mu, q_weight_sig, q_bias_mu, q_bias_sig


if __name__ == "__main__":
    B, IN, OUT = 8, 32, 16

    root = jax.random.PRNGKey(0)
    k_param, k_x, k_nw, k_nb = jax.random.split(root, 4)

    wmu, wsig, bmu, bsig = init_bnn_linear_params(IN, OUT, k_param, "uniform")
    x = jax.random.normal(k_x, (B, IN), dtype=jnp.float32)

    # Reference matching the kernel's bf16-operand / f32-accumulate matmul.
    def ref_linear(xx, ww, bb):
        return lax.dot_general(
            xx.astype(jnp.bfloat16), ww.astype(jnp.bfloat16),
            dimension_numbers=(((1,), (1,)), ((), ())),
            preferred_element_type=jnp.float32) + bb

    # --- mean path (sample_W=False) ---
    y_mean = bnn_linear_forward(x, wmu, wsig, bmu, bsig, sample_W=False)
    jax.block_until_ready(y_mean)
    assert y_mean.shape == (B, OUT)
    assert jnp.allclose(y_mean, ref_linear(x, wmu, bmu), atol=2e-3, rtol=2e-3), \
        "mean-path mismatch vs bf16 reference"
    assert jnp.allclose(y_mean, x @ wmu.T + bmu, atol=5e-2, rtol=5e-2), \
        "mean-path far from f32 reference"

    # --- sampled path (sample_W=True); explicit noise so the ref can match ---
    noise_w = jax.random.normal(k_nw, (OUT, IN), dtype=jnp.float32)
    noise_b = jax.random.normal(k_nb, (OUT,), dtype=jnp.float32)
    y_sample = bnn_linear_forward(x, wmu, wsig, bmu, bsig, sample_W=True,
                                  noise_w=noise_w, noise_b=noise_b)
    jax.block_until_ready(y_sample)
    assert y_sample.shape == (B, OUT)

    w_s = wmu + jax.nn.softplus(wsig) * noise_w
    b_s = bmu + jax.nn.softplus(bsig) * noise_b
    assert jnp.allclose(y_sample, ref_linear(x, w_s, b_s), atol=2e-3, rtol=2e-3), \
        "sample-path mismatch vs bf16 reference"

    print("KERNEL_OK")
</pallas_src>

<mosaic_0001>
module attributes {stable_mosaic.version = 11 : i64} {
  func.func @_bnn_mean_kernel(%arg0: i32, %arg1: i32, %arg2: i32, %arg3: memref<8x128xf32, #tpu.memory_space<vmem>>, %arg4: memref<128x128xf32, #tpu.memory_space<vmem>>, %arg5: memref<1x128xf32, #tpu.memory_space<vmem>>, %arg6: memref<8x128xf32, #tpu.memory_space<vmem>>, %arg7: memref<8x128xf32, #tpu.memory_space<vmem>>) attributes {dimension_semantics = [#tpu.dimension_semantics<parallel>, #tpu.dimension_semantics<parallel>, #tpu.dimension_semantics<arbitrary>], iteration_bounds = array<i64: 1, 1, 1>, scalar_prefetch = 0 : i64, scratch_operands = 1 : i64, tpu.core_type = #tpu.core_type<tc>, window_params = [{transform_indices = @transform_0, window_bounds = array<i64: 8, 128>}, {transform_indices = @transform_1, window_bounds = array<i64: 128, 128>}, {transform_indices = @transform_2, window_bounds = array<i64: 1, 128>}, {transform_indices = @transform_3, window_bounds = array<i64: 8, 128>}]} {
    %c0_i32 = arith.constant 0 : i32
    %0 = arith.cmpi eq, %arg2, %c0_i32 : i32
    %1 = arith.extui %0 : i1 to i32
    %c0_i32_0 = arith.constant 0 : i32
    %2 = arith.cmpi ne, %1, %c0_i32_0 : i32
    scf.if %2 {
      %cst_10 = arith.constant 0.000000e+00 : f32
      %14 = vector.broadcast %cst_10 : f32 to vector<8x128xf32>
      %c0_11 = arith.constant 0 : index
      %c0_12 = arith.constant 0 : index
      %15 = vector.load %arg7[%c0_11, %c0_12] : memref<8x128xf32, #tpu.memory_space<vmem>>, vector<8x128xf32>
      tpu.vector_store %arg7[%c0_11, %c0_12], %14 {strides = array<i32>} : memref<8x128xf32, #tpu.memory_space<vmem>>, vector<8x128xf32>,
    } else {
    }
    %c0 = arith.constant 0 : index
    %c0_1 = arith.constant 0 : index
    %3 = vector.load %arg7[%c0, %c0_1] : memref<8x128xf32, #tpu.memory_space<vmem>>, vector<8x128xf32>
    %c0_2 = arith.constant 0 : index
    %c0_3 = arith.constant 0 : index
    %4 = vector.load %arg3[%c0_2, %c0_3] : memref<8x128xf32, #tpu.memory_space<vmem>>, vector<8x128xf32>
    %5 = arith.truncf %4 : vector<8x128xf32> to vector<8x128xbf16>
    %c0_4 = arith.constant 0 : index
    %c0_5 = arith.constant 0 : index
    %6 = vector.load %arg4[%c0_4, %c0_5] : memref<128x128xf32, #tpu.memory_space<vmem>>, vector<128x128xf32>
    %7 = arith.truncf %6 : vector<128x128xf32> to vector<128x128xbf16>
    %cst = arith.constant dense<0.000000e+00> : vector<8x128xf32>
    %8 = tpu.matmul %5, %7, %cst {dimension_numbers = #tpu.dot_dimension_numbers<[1], [1], [0], [0], [0, 0, 1, 0], [], []>} : vector<8x128xbf16>, vector<128x128xbf16>, vector<8x128xf32> -> vector<8x128xf32>
    %9 = arith.addf %3, %8 : vector<8x128xf32>
    %c0_6 = arith.constant 0 : index
    %c0_7 = arith.constant 0 : index
    %10 = vector.load %arg7[%c0_6, %c0_7] : memref<8x128xf32, #tpu.memory_space<vmem>>, vector<8x128xf32>
    tpu.vector_store %arg7[%c0_6, %c0_7], %9 {strides = array<i32>} : memref<8x128xf32, #tpu.memory_space<vmem>>, vector<8x128xf32>,
    %c0_i32_8 = arith.constant 0 : i32
    %11 = arith.cmpi eq, %arg2, %c0_i32_8 : i32
    %12 = arith.extui %11 : i1 to i32
    %c0_i32_9 = arith.constant 0 : i32
    %13 = arith.cmpi ne, %12, %c0_i32_9 : i32
    scf.if %13 {
      %c0_10 = arith.constant 0 : index
      %c0_11 = arith.constant 0 : index
      %14 = vector.load %arg7[%c0_10, %c0_11] : memref<8x128xf32, #tpu.memory_space<vmem>>, vector<8x128xf32>
      %c0_12 = arith.constant 0 : index
      %c0_13 = arith.constant 0 : index
      %15 = vector.load %arg5[%c0_12, %c0_13] : memref<1x128xf32, #tpu.memory_space<vmem>>, vector<1x128xf32>
      %16 = vector.broadcast %15 : vector<1x128xf32> to vector<8x128xf32>
      %17 = arith.addf %14, %16 : vector<8x128xf32>
      %c0_14 = arith.constant 0 : index
      %c0_15 = arith.constant 0 : index
      %18 = vector.load %arg6[%c0_14, %c0_15] : memref<8x128xf32, #tpu.memory_space<vmem>>, vector<8x128xf32>
      tpu.vector_store %arg6[%c0_14, %c0_15], %17 {strides = array<i32>} : memref<8x128xf32, #tpu.memory_space<vmem>>, vector<8x128xf32>,
    } else {
    }
    return
  }
  func.func @transform_0(%arg0: i32, %arg1: i32, %arg2: i32) -> (i32, i32) {
    %c0_i32 = arith.constant 0 : i32
    return %arg0, %arg2 : i32, i32
  }
  func.func @transform_1(%arg0: i32, %arg1: i32, %arg2: i32) -> (i32, i32) {
    %c0_i32 = arith.constant 0 : i32
    return %arg1, %arg2 : i32, i32
  }
  func.func @transform_2(%arg0: i32, %arg1: i32, %arg2: i32) -> (i32, i32) {
    %c0_i32 = arith.constant 0 : i32
    %c0_i32_0 = arith.constant 0 : i32
    return %c0_i32, %arg1 : i32, i32
  }
  func.func @transform_3(%arg0: i32, %arg1: i32, %arg2: i32) -> (i32, i32) {
    %c0_i32 = arith.constant 0 : i32
    return %arg0, %arg1 : i32, i32
  }
}

</mosaic_0001>

<llo_original>
// kernel: tpu_custom_call.1
$region0: #{tpu_custom_call.1}
  #allocation0 [shape = 'u32[]', space=smem, size = 0x4, offset = 0x4, fixed_abs, tag = 'smem constant byte address 0x4 - core index']
  #allocation1 [shape = 'u32[144,128]{1,0:T(1,128)}', space=vmem, size = 0x12000, scoped, tag = 'internal scratch']
  #allocation2 [shape = 'f32[8,128]{1,0:T(8,128)}', space=vmem, size = 0x1000, scoped, tag = 'scratch operand']
  %s0 = inlined_call_operand.hbm [shape: f32[8,128], index: 0, kind: input, shape index: {}]
  %s1 = inlined_call_operand.hbm [shape: f32[128,128], index: 1, kind: input, shape index: {}]
  %s2 = inlined_call_operand.vmem [shape: f32[1,128], index: 2, kind: input, shape index: {}]
  %s3 = inlined_call_operand.hbm [shape: f32[8,128], index: 3, kind: output, shape index: {}]
  %s4 = sld [smem:[#allocation0]]
  $region38: #{tpu_custom_call.1} parent=0
    _
  %s6 = ssub.s32 1, %s4
  %s7 = scalar_select 0, %s6, %s4
  $region1: #{tpu_custom_call.1} parent=0
    #allocation3 [shape = 'u8[4096]{0}', space=vmem, size = 0x1000, scoped, tag = 'input window, operand 0, single buffered']
    #allocation4 [shape = 's32[1]{0}', space=sflag, size = 0x4, scoped, tag = 'scoped memory for tpu_custom_call.1']
    #allocation5 [shape = 's32[1]{0}', space=sflag, size = 0x4, scoped, tag = 'scoped memory for tpu_custom_call.1']
    #allocation6 [shape = 'u8[65536]{0}', space=vmem, size = 0x10000, scoped, tag = 'input window, operand 1, single buffered']
    #allocation7 [shape = 's32[1]{0}', space=sflag, size = 0x4, scoped, tag = 'scoped memory for tpu_custom_call.1']
    #allocation8 [shape = 'u8[4096]{0}', space=vmem, size = 0x1000, scoped, tag = 'output window, operand 0, single buffered']
    %8 = vsyncpa [#allocation4], 0
    %9 = vsyncpa [#allocation7], 0
    %10 = vsyncpa [#allocation5], 0
    // Predicated region
    $region2: #{tpu_custom_call.1} parent=1 // pred_check
      _
    $region3: #{tpu_custom_call.1} parent=1 // pred_check_branch
      %12 = sbr.rel (0) target = $region5
    $region4: #{tpu_custom_call.1} parent=1 // pred_region
      %s14 = ssub.s32 128, 128
      %15 = vsyncadd [#allocation4], %s14
      %s17 = sshll.u32 [#allocation3], 4
      %s18 = int_to_ptr.vmem [resolvable:$true] %s17
      %20 = dma.hbm_to_vmem [thread:$0]  %s0, 128, %s18, [#allocation4]
    $region5: #{tpu_custom_call.1} parent=1 // pred_fallthru
      _
    // Predicated region
    $region6: #{tpu_custom_call.1} parent=1 // pred_check
      _
    $region7: #{tpu_custom_call.1} parent=1 // pred_check_branch
      %22 = sbr.rel (0) target = $region9
    $region8: #{tpu_custom_call.1} parent=1 // pred_region
      %s24 = ssub.s32 2048, 2048
      %25 = vsyncadd [#allocation7], %s24
      %s26 = sshll.u32 [#allocation6], 4
      %s27 = int_to_ptr.vmem [resolvable:$true] %s26
      %32 = dma.hbm_to_vmem [thread:$0]  %s1, 2048, %s27, [#allocation7], 128, 128, 8
    $region9: #{tpu_custom_call.1} parent=1 // pred_fallthru
      _
    // Predicated region
    $region10: #{tpu_custom_call.1} parent=1 // pred_check
      _
    $region11: #{tpu_custom_call.1} parent=1 // pred_check_branch
      %34 = sbr.rel (0) target = $region13
    $region12: #{tpu_custom_call.1} parent=1 // pred_region
      _
    $region13: #{tpu_custom_call.1} parent=1 // pred_fallthru
      _
    // Predicated region
    $region14: #{tpu_custom_call.1} parent=1 // pred_check
      _
    $region15: #{tpu_custom_call.1} parent=1 // pred_check_branch
      %36 = sbr.rel (0) target = $region17
    $region16: #{tpu_custom_call.1} parent=1 // pred_region
      %37 = dma.done [#allocation4], 128
    $region17: #{tpu_custom_call.1} parent=1 // pred_fallthru
      _
    // Predicated region
    $region18: #{tpu_custom_call.1} parent=1 // pred_check
      _
    $region19: #{tpu_custom_call.1} parent=1 // pred_check_branch
      %39 = sbr.rel (0) target = $region21
    $region20: #{tpu_custom_call.1} parent=1 // pred_region
      %40 = dma.done [#allocation7], 2048
    $region21: #{tpu_custom_call.1} parent=1 // pred_fallthru
      _
    %p42 = scmp.eq.s32.totalorder 0, 0
    // Predicated region
    $region22: #{tpu_custom_call.1} parent=1 // pred_check
      %p43 = pneg %p42
    $region23: #{tpu_custom_call.1} parent=1 // pred_check_branch
      %45 = sbr.rel (%p43) target = $region25
    $region24: #{tpu_custom_call.1} parent=1 // pred_region
      %46 = vst [vmem:[#allocation2] sm:$0xff] 0.0
    $region25: #{tpu_custom_call.1} parent=1 // pred_fallthru
      _
    %v47 = vld [vmem:[#allocation2] sm:$0xff]
    %v48 = vld [vmem:[#allocation3] sm:$0xff]
    %v49 = vpack.c.bf16 %v48, %v48
    %v50 = vld [vmem:[#allocation6] sm:$0xff]
    %v51 = vld [vmem:[#allocation6 + $0x8] sm:$0xff]
    %v52 = vld [vmem:[#allocation6 + $0x10] sm:$0xff]
    %v53 = vld [vmem:[#allocation6 + $0x18] sm:$0xff]
    %v54 = vld [vmem:[#allocation6 + $0x20] sm:$0xff]
    %v55 = vld [vmem:[#allocation6 + $0x28] sm:$0xff]
    %v56 = vld [vmem:[#allocation6 + $0x30] sm:$0xff]
    %v57 = vld [vmem:[#allocation6 + $0x38] sm:$0xff]
    %v58 = vld [vmem:[#allocation6 + $0x40] sm:$0xff]
    %v59 = vld [vmem:[#allocation6 + $0x48] sm:$0xff]
    %v60 = vld [vmem:[#allocation6 + $0x50] sm:$0xff]
    %v61 = vld [vmem:[#allocation6 + $0x58] sm:$0xff]
    %v62 = vld [vmem:[#allocation6 + $0x60] sm:$0xff]
    %v63 = vld [vmem:[#allocation6 + $0x68] sm:$0xff]
    %v64 = vld [vmem:[#allocation6 + $0x70] sm:$0xff]
    %v65 = vld [vmem:[#allocation6 + $0x78] sm:$0xff]
    %v66 = vpack.c.bf16 %v51, %v50
    %v67 = vpack.c.bf16 %v53, %v52
    %v68 = vpack.c.bf16 %v55, %v54
    %v69 = vpack.c.bf16 %v57, %v56
    %v70 = vpack.c.bf16 %v59, %v58
    %v71 = vpack.c.bf16 %v61, %v60
    %v72 = vpack.c.bf16 %v63, %v62
    %v73 = vpack.c.bf16 %v65, %v64
    %74 = vmatprep.subr.bf16.mxu0 0
    %75 = vmatpush1.bf16.xpose.msra.mxu0 %v66
    %76 = vmatprep.subr.bf16.mxu0 0
    %77 = vmatpush1.bf16.xpose.msra.mxu0 %v67
    %78 = vmatprep.subr.bf16.mxu0 0
    %79 = vmatpush1.bf16.xpose.msra.mxu0 %v68
    %80 = vmatprep.subr.bf16.mxu0 0
    %81 = vmatpush1.bf16.xpose.msra.mxu0 %v69
    %82 = vmatprep.subr.bf16.mxu0 0
    %83 = vmatpush1.bf16.xpose.msra.mxu0 %v70
    %84 = vmatprep.subr.bf16.mxu0 0
    %85 = vmatpush1.bf16.xpose.msra.mxu0 %v71
    %86 = vmatprep.subr.bf16.mxu0 0
    %87 = vmatpush1.bf16.xpose.msra.mxu0 %v72
    %88 = vmatprep.subr.bf16.mxu0 0
    %89 = vmatpush1.bf16.xpose.msra.mxu0 %v73
    %90 = vmatprep.subr.bf16.mxu0 0
    %91 = vmatpush1.bf16.xpose.msra.mxu0 0
    %92 = vmatprep.subr.bf16.mxu0 0
    %93 = vmatpush1.bf16.xpose.msra.mxu0 0
    %94 = vmatprep.subr.bf16.mxu0 0
    %95 = vmatpush1.bf16.xpose.msra.mxu0 0
    %96 = vmatprep.subr.bf16.mxu0 0
    %97 = vmatpush1.bf16.xpose.msra.mxu0 0
    %98 = vmatprep.subr.bf16.mxu0 0
    %99 = vmatpush1.bf16.xpose.msra.mxu0 0
    %100 = vmatprep.subr.bf16.mxu0 0
    %101 = vmatpush1.bf16.xpose.msra.mxu0 0
    %102 = vmatprep.subr.bf16.mxu0 0
    %103 = vmatpush1.bf16.xpose.msra.mxu0 0
    %104 = vmatprep.subr.bf16.mxu0 0
    %105 = vmatpush1.bf16.xpose.msra.mxu0 0
    %106 = vmatprep.mubr.bf16.mxu0 0
    %107 = vmatmul.mubr.bf16.gmra.mrb[0].mxu0 %v49
    %v108 = vpop.f32.mrb[0].mxu0
    %v109 = vadd.f32 0.0, %v108
    %v110 = vpop.f32.mrb[0].mxu0
    %v111 = vpop.f32.mrb[0].mxu0
    %v112 = vpop.f32.mrb[0].mxu0
    %113 = vdwg.mxu0
    %v114 = vadd.f32 %v47, %v109
    %115 = vst [vmem:[#allocation2] sm:$0xff] %v114
    // Predicated region
    $region26: #{tpu_custom_call.1} parent=1 // pred_check
      %p116 = pneg %p42
    $region27: #{tpu_custom_call.1} parent=1 // pred_check_branch
      %118 = sbr.rel (%p116) target = $region29
    $region28: #{tpu_custom_call.1} parent=1 // pred_region
      %v119 = vld [vmem:[#allocation2] sm:$0xff]
      %v120 = vld [vmem:[%s2] sm:$0x1]
      %v122 = vlaneseq
      %v123 = vshrl.u32 %v122, 7
      %v124 = vsub.s32 0, %v123
      %v125 = vrot.slane %v120, %v124
      %v127 = vadd.f32 %v119, %v125
      %128 = vst [vmem:[#allocation8] sm:$0xff] %v127
    $region29: #{tpu_custom_call.1} parent=1 // pred_fallthru
      _
    // Predicated region
    $region30: #{tpu_custom_call.1} parent=1 // pred_check
      _
    $region31: #{tpu_custom_call.1} parent=1 // pred_check_branch
      %130 = sbr.rel (0) target = $region33
    $region32: #{tpu_custom_call.1} parent=1 // pred_region
      %s132 = ssub.s32 128, 128
      %133 = vsyncadd [#allocation5], %s132
      %s135 = sshll.u32 [#allocation8], 4
      %s136 = int_to_ptr.vmem [resolvable:$true] %s135
      %138 = dma.vmem_to_hbm [thread:$0]  %s136, 128, %s3, [#allocation5]
    $region33: #{tpu_custom_call.1} parent=1 // pred_fallthru
      _
    // Predicated region
    $region34: #{tpu_custom_call.1} parent=1 // pred_check
      _
    $region35: #{tpu_custom_call.1} parent=1 // pred_check_branch
      %140 = sbr.rel (0) target = $region37
    $region36: #{tpu_custom_call.1} parent=1 // pred_region
      %141 = dma.done [#allocation5], 128
    $region37: #{tpu_custom_call.1} parent=1 // pred_fallthru
      _
    %142 = vsyncpa [#allocation4], 1
    %143 = vsyncpa [#allocation7], 1
    %144 = vsyncpa [#allocation5], 1

</llo_original>
